<compile_context>
chip_gen: v7x
topology: tpu7x:2x2x1
jax: 0.10.0
libtpu: 0.0.40
codegen_flags: <defaults>
</compile_context>

<pallas_src>
import random
from collections import deque, namedtuple

import jax
import jax.numpy as jnp
from jax.experimental import pallas as pl
from jax.experimental.pallas import tpu as pltpu


# ----------------------------------------------------------------------------
# ReplayMemory: pure host-side Python state (no Pallas equivalent needed).
# ----------------------------------------------------------------------------
Transition = namedtuple(
    "Transition", ("state", "action", "next_state", "reward", "terminal")
)


class ReplayMemory:
    def __init__(self, capacity):
        self.capacity = capacity
        self.memory = deque(maxlen=capacity)

    def push(self, s, a, n_s, r, t):
        self.memory.append(Transition(s, a, n_s, r, t))

    def sample(self, batch_size):
        return random.sample(self.memory, batch_size)

    def __len__(self):
        return len(self.memory)


# ----------------------------------------------------------------------------
# Pallas kernel: whole-array HBM->HBM DMA identity copy.
#
# in/out live in pl.ANY (left in HBM); the body issues one async copy and
# waits on its DMA semaphore.  No VMEM staging, no vreg round trip, no grid.
# ----------------------------------------------------------------------------
_LANES = 128  # TPU lane width


def _hbm_copy_kernel(src_hbm, dst_hbm, sem):
    cp = pltpu.make_async_copy(src_hbm, dst_hbm, sem)
    cp.start()
    cp.wait()


def _hbm_copy(x: jax.Array) -> jax.Array:
    return pl.pallas_call(
        _hbm_copy_kernel,
        out_shape=jax.ShapeDtypeStruct(x.shape, x.dtype),
        in_specs=[pl.BlockSpec(memory_space=pl.ANY)],
        out_specs=pl.BlockSpec(memory_space=pl.ANY),
        scratch_shapes=[pltpu.SemaphoreType.DMA(())],
    )(x)


@jax.jit
def observation_passthrough(observation: jax.Array) -> jax.Array:
    """Identity copy of `observation` via a single HBM->HBM DMA.

    When the element count is a multiple of 128 the array is viewed as a
    lane-dense (rows, 128) slab (free reshape of contiguous data) so the
    stored/copied bytes carry no minor-dim layout padding; otherwise the
    original shape is copied directly.
    """
    orig_shape = observation.shape
    total = observation.size
    if total % _LANES == 0:
        slab = observation.reshape(total // _LANES, _LANES)
    else:
        slab = observation  # bulk DMA is shape-agnostic; no pad/slice needed
    out = _hbm_copy(slab)
    return out.reshape(orig_shape)


# ----------------------------------------------------------------------------
# GraphTrainer: mirrors the PyTorch module.
# ----------------------------------------------------------------------------
class GraphTrainer:
    def __init__(self):
        self.memory = ReplayMemory(capacity=10000)

    def forward(self, observation):
        # TODO(synk): the reference forward is `pass` (no model, no compute),
        # so per the perf review we dispatch nothing here and return None.
        # The Pallas pass-through kernel above is kept as the device-side
        # equivalent and is exercised in __main__.
        return None

    __call__ = forward

    def push(self, s, a, n_s, r, t):
        self.memory.push(s, a, n_s, r, t)


if __name__ == "__main__":
    key = jax.random.PRNGKey(0)
    # Small NCHW observation consistent with a vision-style RL observation.
    observation = jax.random.normal(key, (2, 4, 16, 16), dtype=jnp.float32)

    trainer = GraphTrainer()

    # Exercise the Pallas kernel directly and verify identity semantics.
    out = observation_passthrough(observation)
    jax.block_until_ready(out)
    assert out.shape == observation.shape and out.dtype == observation.dtype
    assert bool(jnp.all(out == observation))

    # Faithful forward: returns None (like the PyTorch `pass`), no device work.
    result = trainer(observation)
    assert result is None

    # Host-side replay-memory push (no device compute involved).
    k1, k2 = jax.random.split(key)
    next_obs = jax.random.normal(k2, (2, 4, 16, 16), dtype=jnp.float32)
    trainer.push(observation, 1, next_obs, 0.5, False)
    assert len(trainer.memory) == 1

    print("KERNEL_OK")
</pallas_src>

<mosaic_0001>
module attributes {stable_mosaic.version = 11 : i64} {
  func.func @_hbm_copy_kernel(%arg0: memref<16x128xf32, #tpu.memory_space<any>>, %arg1: memref<16x128xf32, #tpu.memory_space<any>>, %arg2: memref<!tpu.dma_semaphore, #tpu.memory_space<semaphore_mem>>) attributes {dimension_semantics = [], scalar_prefetch = 0 : i64, scratch_operands = 1 : i64, tpu.core_type = #tpu.core_type<tc>} {
    tpu.enqueue_dma source(%arg0 : memref<16x128xf32, #tpu.memory_space<any>>) target(%arg1 : memref<16x128xf32, #tpu.memory_space<any>>) target_semaphore(%arg2 : memref<!tpu.dma_semaphore, #tpu.memory_space<semaphore_mem>>)
    tpu.wait_dma2 semaphore(%arg2 : memref<!tpu.dma_semaphore, #tpu.memory_space<semaphore_mem>>) src(%arg0 : memref<16x128xf32, #tpu.memory_space<any>>) dst(%arg1 : memref<16x128xf32, #tpu.memory_space<any>>)
    return
  }
}

</mosaic_0001>

<llo_original>
// kernel: observation_passthrough.1
$region0: #{observation_passthrough.1}
  #allocation0 [shape = 'u32[]', space=smem, size = 0x4, offset = 0x4, fixed_abs, tag = 'smem constant byte address 0x4 - core index']
  #allocation1 [shape = 'u32[144,128]{1,0:T(1,128)}', space=vmem, size = 0x12000, scoped, tag = 'internal scratch']
  #allocation2 [shape = 's32[1]{0}', space=sflag, size = 0x4, scoped, tag = 'scratch operand']
  #allocation3 [shape = 's32[]', space=sflag, size = 0x4, offset = 0, fixed_abs, tag = 'sflag constant byte address 0x0 - dummy sync flag']
  %s0 = inlined_call_operand.vmem [shape: f32[16,128], index: 0, kind: input, shape index: {}]
  %s1 = inlined_call_operand.vmem [shape: f32[16,128], index: 1, kind: output, shape index: {}]
  %s2 = sld [smem:[#allocation0]]
  $region36: #{observation_passthrough.1} parent=0
    _
  %s4 = ssub.s32 1, %s2
  %s5 = scalar_select 0, %s4, %s2
  %p7 = scmp.lt.u32.totalorder 16, 8
  %p8 = pneg %p7
  // Predicated region
  $region2: #{observation_passthrough.1} parent=0 // pred_check
    _
  $region3: #{observation_passthrough.1} parent=0 // pred_check_branch
    %10 = sbr.rel (%p7) target = $region5
  $region4: #{observation_passthrough.1} parent=0 // pred_region
    %s25 = sand.u32 16, 7
    %p26 = scmp.eq.s32.totalorder %s25, 0
    // Predicated region
    $region17: #{observation_passthrough.1} parent=4 // pred_check
      %p27 = pneg %p26
    $region18: #{observation_passthrough.1} parent=4 // pred_check_branch
      %29 = sbr.rel (%p27) target = $region20
    $region19: #{observation_passthrough.1} parent=4 // pred_region
      loop: start=0, step=1, limit=1
      $region21: #{observation_passthrough.1} parent=19 // loop_pre_header
        _
      $region22: #{observation_passthrough.1} parent=19 // loop_header
        %s31 = sphi 0, %s35
        %p32 = scmp.ge.s32.totalorder %s31, 1
        %s36 = sphi %s0, %s0
        %s37 = sphi %s1, %s1
      $region23: #{observation_passthrough.1} parent=19 // loop_header_branch
        %34 = sbr.rel (%p32) target = $region27
      $region24: #{observation_passthrough.1} parent=19 // loop_body
        %v38 = vld [vmem:[%s36] sm:$0xff]
        %39 = vst [vmem:[%s37] sm:$0xff] %v38
        %v40 = vld [vmem:[%s36 + $0x8] sm:$0xff]
        %41 = vst [vmem:[%s37 + $0x8] sm:$0xff] %v40
      $region25: #{observation_passthrough.1} parent=19 // loop_footer
        %s35 = sadd.s32 1, %s31
      $region26: #{observation_passthrough.1} parent=19 // loop_footer_branch
        %30 = sbr.rel target = $region22
      $region27: #{observation_passthrough.1} parent=19 // loop_exit
        _
    $region20: #{observation_passthrough.1} parent=4 // pred_fallthru
      _
    %p42 = pneg %p26
    // Predicated region
    $region28: #{observation_passthrough.1} parent=4 // pred_check
      _
    $region29: #{observation_passthrough.1} parent=4 // pred_check_branch
      %44 = sbr.rel (%p26) target = $region31
    $region30: #{observation_passthrough.1} parent=4 // pred_region
      %s45 = sand.u32 16, 7
    $region31: #{observation_passthrough.1} parent=4 // pred_fallthru
      _
  $region5: #{observation_passthrough.1} parent=0 // pred_fallthru
    _
  // Predicated region
  $region6: #{observation_passthrough.1} parent=0 // pred_check
    %p11 = pneg %p7
  $region7: #{observation_passthrough.1} parent=0 // pred_check_branch
    %13 = sbr.rel (%p11) target = $region9
  $region8: #{observation_passthrough.1} parent=0 // pred_region
    %s14 = sshllo.u32 0, 16
    loop: start=0, step=1, limit=1
    $region10: #{observation_passthrough.1} parent=8 // loop_pre_header
      _
    $region11: #{observation_passthrough.1} parent=8 // loop_header
      %s16 = sphi 0, %s20
      %p17 = scmp.ge.s32.totalorder %s16, 1
      %s21 = sphi %s0, %s0
      %s22 = sphi %s1, %s1
    $region12: #{observation_passthrough.1} parent=8 // loop_header_branch
      %19 = sbr.rel (%p17) target = $region16
    $region13: #{observation_passthrough.1} parent=8 // loop_body
      %v23 = vld [vmem:[%s21] sm:%s14]
      %24 = vst [vmem:[%s22] sm:%s14] %v23
    $region14: #{observation_passthrough.1} parent=8 // loop_footer
      %s20 = sadd.s32 1, %s16
    $region15: #{observation_passthrough.1} parent=8 // loop_footer_branch
      %15 = sbr.rel target = $region11
    $region16: #{observation_passthrough.1} parent=8 // loop_exit
      _
  $region9: #{observation_passthrough.1} parent=0 // pred_fallthru
    _
  // Predicated region
  $region32: #{observation_passthrough.1} parent=0 // pred_check
    _
  $region33: #{observation_passthrough.1} parent=0 // pred_check_branch
    %48 = sbr.rel (0) target = $region35
  $region34: #{observation_passthrough.1} parent=0 // pred_region
    %49 = vsyncadd [#allocation2], 256
  $region35: #{observation_passthrough.1} parent=0 // pred_fallthru
    _
  %s50 = smul.u32 16, 1
  %s51 = sshll.u32 %s50, 4
  %52 = dma.done [#allocation2], %s51
  %53 = vsyncmov [#allocation2]
  %s54 = vpop.sfrf %53
  %p55 = scmp.eq.s32.totalorder %s54, 0
  %p56 = pneg %p55
  %58 = shalt.err (%p56)

</llo_original>
